<compile_context>
chip_gen: v7x
topology: tpu7x:2x2x1
jax: 0.10.0
libtpu: 0.0.40
codegen_flags: <defaults>
</compile_context>

<pallas_src>
import jax
import jax.numpy as jnp
from jax.experimental import pallas as pl
from jax.experimental.pallas import tpu as pltpu

HID_DIM = 32        # hid_dim (feature size F)
NODES = 8           # nodes per graph (dense layout)
GRAPHS = 2          # graphs in the batch (small test size)
GRAPH_BLOCK = 512   # graphs per grid step (tunable; size to the production batch)


def _attention_readout_kernel(x_ref, w_ref, out_ref, wts_ref):
    """use_attention=True path for one block of GB graphs.

    x_ref   : (GB, N, F)  node features
    w_ref   : (1, F)      Linear(hid_dim, 1) weight row (resident in VMEM)
    out_ref : (GB, 2F)    concat([weighted_sum_readout, max_readout], axis=-1)
    wts_ref : (GB, N)     per-node softmax weights (lane-dense store)
    """
    x = x_ref[...]
    gb, n, f = x.shape
    w = w_ref[...]                                    # (1, F)

    # Per-node attention logits: VPU multiply + lane reduction.  An MXU shape of
    # (GB*N, 32) @ (32, 1) wastes K and all but one result column — it is really a
    # reduction.  Bias is dropped: softmax over nodes is shift-invariant.
    z = jnp.sum(x * w, axis=-1, keepdims=True)        # (GB, N, 1)

    # softmax over the nodes of each graph (dgl.softmax_nodes).
    zmax = jnp.max(z, axis=1, keepdims=True)
    e = jnp.exp(z - zmax)
    a = e / jnp.sum(e, axis=1, keepdims=True)         # (GB, N, 1)

    wsum = jnp.sum(a * x, axis=1)                     # weighted 'sum' readout (GB, F)
    xmax = jnp.max(x, axis=1)                         # 'max' readout          (GB, F)

    # Two direct sub-slice stores — no temporary concat buffer.
    out_ref[:, :f] = wsum
    out_ref[:, f:] = xmax
    # Lane-dense weights store: (GB, N) instead of 1-lane-per-row masked stores.
    wts_ref[...] = a.reshape(gb, n)


def _mean_max_readout_kernel(x_ref, out_ref):
    """use_attention=False path: concat([mean, max]) per graph block."""
    x = x_ref[...]
    n, f = x.shape[1], x.shape[2]
    out_ref[:, :f] = jnp.sum(x, axis=1) * (1.0 / n)
    out_ref[:, f:] = jnp.max(x, axis=1)


def _choose_graph_block(g, graph_block):
    # Block big enough to amortize the ~0.35 µs per-step overhead, but never larger
    # than the (sublane-aligned) batch.  For v7x, size `graph_block` so production
    # batches produce >= 2 "parallel" grid steps (both TensorCores busy).
    g_aligned = ((g + 7) // 8) * 8
    gb = min(((graph_block + 7) // 8) * 8, g_aligned)
    return max(gb, 8)


def _pad_graphs(node_feats, gb):
    # Zero-padding to a GRAPH_BLOCK multiple is safe ONLY because padded rows are
    # sliced off on the host before anyone consumes them (a padded graph's softmax
    # would be uniform and its max would be 0).
    g = node_feats.shape[0]
    g_pad = ((g + gb - 1) // gb) * gb
    if g_pad != g:
        node_feats = jnp.pad(node_feats, ((0, g_pad - g), (0, 0), (0, 0)))
    return node_feats, g_pad


def _compiler_params(gb, n, f):
    # Double-buffered input + output footprint per grid step (bytes).  Only raise the
    # scoped-VMEM limit when a very large GRAPH_BLOCK would exceed the defaults
    # (16 MiB on v5e, 32 MiB on v6e/v7x); at sane block sizes the default is fine.
    step_bytes = 2 * (gb * n * f * 4 + gb * 2 * f * 4 + gb * n * 4)
    kwargs = {"dimension_semantics": ("parallel",)}
    if step_bytes > 12 * 1024 * 1024:
        kwargs["vmem_limit_bytes"] = min(2 * step_bytes + (4 << 20), 100 << 20)
    return pltpu.CompilerParams(**kwargs)


def readout_attention(node_feats, weight, bias, graph_block=GRAPH_BLOCK):
    """Readout.forward with use_attention=True.

    node_feats : (G, N, F) float32
    weight     : (1, F)  torch nn.Linear(hid_dim, 1).weight
    bias       : (1,)    torch nn.Linear(hid_dim, 1).bias (mathematically dead here)
    returns (readout (G, 2F), weights (G, N, 1))
    """
    g, n, f = node_feats.shape
    gb = _choose_graph_block(g, graph_block)
    x, g_pad = _pad_graphs(node_feats, gb)
    wrow = weight.reshape(1, f).astype(jnp.float32)
    del bias  # softmax_nodes is invariant to a constant logit shift -> no effect

    out, wts = pl.pallas_call(
        _attention_readout_kernel,
        out_shape=(jax.ShapeDtypeStruct((g_pad, 2 * f), jnp.float32),
                   jax.ShapeDtypeStruct((g_pad, n), jnp.float32)),
        grid_spec=pltpu.PrefetchScalarGridSpec(
            num_scalar_prefetch=0,
            grid=(g_pad // gb,),
            in_specs=[pl.BlockSpec((gb, n, f), lambda i: (i, 0, 0)),
                      pl.BlockSpec((1, f), lambda i: (0, 0))],   # resident weight row
            out_specs=[pl.BlockSpec((gb, 2 * f), lambda i: (i, 0)),
                       pl.BlockSpec((gb, n), lambda i: (i, 0))],
        ),
        compiler_params=_compiler_params(gb, n, f),
    )(x, wrow)
    # Host-side reshape back to the per-node (., 1) weight column of the torch module.
    return out[:g], wts[:g].reshape(g, n, 1)


def readout_mean_max(node_feats, graph_block=GRAPH_BLOCK):
    """Readout.forward with use_attention=False: concat([mean, max])."""
    g, n, f = node_feats.shape
    gb = _choose_graph_block(g, graph_block)
    x, g_pad = _pad_graphs(node_feats, gb)
    out = pl.pallas_call(
        _mean_max_readout_kernel,
        out_shape=jax.ShapeDtypeStruct((g_pad, 2 * f), jnp.float32),
        grid_spec=pltpu.PrefetchScalarGridSpec(
            num_scalar_prefetch=0,
            grid=(g_pad // gb,),
            in_specs=[pl.BlockSpec((gb, n, f), lambda i: (i, 0, 0))],
            out_specs=pl.BlockSpec((gb, 2 * f), lambda i: (i, 0)),
        ),
        compiler_params=_compiler_params(gb, n, f),
    )(x)
    return out[:g]


# ----------------------------- pure-JAX references -----------------------------

def reference_attention(node_feats, weight, bias):
    z = jnp.einsum('gnf,of->gno', node_feats, weight) + bias    # (G, N, 1)
    a = jax.nn.softmax(z, axis=1)
    wsum = jnp.sum(a * node_feats, axis=1)
    xmax = jnp.max(node_feats, axis=1)
    return jnp.concatenate([wsum, xmax], axis=1), a


def reference_mean_max(node_feats):
    mean = jnp.mean(node_feats, axis=1)
    xmax = jnp.max(node_feats, axis=1)
    return jnp.concatenate([mean, xmax], axis=1)


if __name__ == "__main__":
    key = jax.random.PRNGKey(0)
    k_x, k_w, k_b = jax.random.split(key, 3)
    node_feats = jax.random.normal(k_x, (GRAPHS, NODES, HID_DIM), jnp.float32)
    weight = 0.1 * jax.random.normal(k_w, (1, HID_DIM), jnp.float32)   # Linear(hid_dim, 1).weight
    bias = 0.1 * jax.random.normal(k_b, (1,), jnp.float32)             # Linear(hid_dim, 1).bias

    # use_attention=True path
    out_attn, wts = readout_attention(node_feats, weight, bias)
    out_attn = jax.block_until_ready(out_attn)
    wts = jax.block_until_ready(wts)
    ref_out, ref_wts = reference_attention(node_feats, weight, bias)
    assert out_attn.shape == (GRAPHS, 2 * HID_DIM)
    assert wts.shape == (GRAPHS, NODES, 1)
    assert jnp.allclose(out_attn, ref_out, atol=1e-5, rtol=1e-5), (
        f"attention readout max abs err {jnp.max(jnp.abs(out_attn - ref_out))}")
    assert jnp.allclose(wts, ref_wts, atol=1e-5, rtol=1e-5), (
        f"attention weights max abs err {jnp.max(jnp.abs(wts - ref_wts))}")

    # use_attention=False path
    out_mm = readout_mean_max(node_feats)
    out_mm = jax.block_until_ready(out_mm)
    ref_mm = reference_mean_max(node_feats)
    assert out_mm.shape == (GRAPHS, 2 * HID_DIM)
    assert jnp.allclose(out_mm, ref_mm, atol=1e-5, rtol=1e-5), (
        f"mean/max readout max abs err {jnp.max(jnp.abs(out_mm - ref_mm))}")

    print("KERNEL_OK")
</pallas_src>

<mosaic_0001>
module attributes {stable_mosaic.version = 11 : i64} {
  func.func @_attention_readout_kernel(%arg0: i32, %arg1: memref<8x8x32xf32, #tpu.memory_space<vmem>>, %arg2: memref<1x32xf32, #tpu.memory_space<vmem>>, %arg3: memref<8x64xf32, #tpu.memory_space<vmem>>, %arg4: memref<8x8xf32, #tpu.memory_space<vmem>>) attributes {dimension_semantics = [#tpu.dimension_semantics<parallel>], iteration_bounds = array<i64: 1>, scalar_prefetch = 0 : i64, scratch_operands = 0 : i64, tpu.core_type = #tpu.core_type<tc>, window_params = [{transform_indices = @transform_0, window_bounds = array<i64: 8, 8, 32>}, {pipeline_mode = #tpu.pipeline_mode<synchronous>, transform_indices = @transform_1, window_bounds = array<i64: 1, 32>}, {transform_indices = @transform_2, window_bounds = array<i64: 8, 64>}, {transform_indices = @transform_3, window_bounds = array<i64: 8, 8>}]} {
    %c0 = arith.constant 0 : index
    %c0_0 = arith.constant 0 : index
    %c0_1 = arith.constant 0 : index
    %0 = vector.load %arg1[%c0, %c0_0, %c0_1] : memref<8x8x32xf32, #tpu.memory_space<vmem>>, vector<8x8x32xf32>
    %c0_2 = arith.constant 0 : index
    %c0_3 = arith.constant 0 : index
    %1 = vector.load %arg2[%c0_2, %c0_3] : memref<1x32xf32, #tpu.memory_space<vmem>>, vector<1x32xf32>
    %2 = vector.shape_cast %1 : vector<1x32xf32> to vector<1x1x32xf32>
    %3 = vector.broadcast %2 : vector<1x1x32xf32> to vector<8x8x32xf32>
    %4 = arith.mulf %0, %3 : vector<8x8x32xf32>
    %cst = arith.constant dense<0.000000e+00> : vector<8x8xf32>
    %5 = vector.multi_reduction <add>, %4, %cst [2] : vector<8x8x32xf32> to vector<8x8xf32>
    %6 = vector.shape_cast %5 : vector<8x8xf32> to vector<8x8x1xf32>
    %cst_4 = arith.constant dense<0xFF800000> : vector<8x1xf32>
    %7 = vector.multi_reduction <maximumf>, %6, %cst_4 [1] : vector<8x8x1xf32> to vector<8x1xf32>
    %8 = vector.shape_cast %7 : vector<8x1xf32> to vector<8x1x1xf32>
    %9 = vector.broadcast %8 : vector<8x1x1xf32> to vector<8x8x1xf32>
    %10 = arith.subf %6, %9 : vector<8x8x1xf32>
    %11 = math.exp %10 : vector<8x8x1xf32>
    %cst_5 = arith.constant dense<0.000000e+00> : vector<8x1xf32>
    %12 = vector.multi_reduction <add>, %11, %cst_5 [1] : vector<8x8x1xf32> to vector<8x1xf32>
    %13 = vector.shape_cast %12 : vector<8x1xf32> to vector<8x1x1xf32>
    %14 = vector.broadcast %13 : vector<8x1x1xf32> to vector<8x8x1xf32>
    %15 = arith.divf %11, %14 : vector<8x8x1xf32>
    %16 = vector.broadcast %15 : vector<8x8x1xf32> to vector<8x8x32xf32>
    %17 = arith.mulf %16, %0 : vector<8x8x32xf32>
    %cst_6 = arith.constant dense<0.000000e+00> : vector<8x32xf32>
    %18 = vector.multi_reduction <add>, %17, %cst_6 [1] : vector<8x8x32xf32> to vector<8x32xf32>
    %cst_7 = arith.constant dense<0xFF800000> : vector<8x32xf32>
    %19 = vector.multi_reduction <maximumf>, %0, %cst_7 [1] : vector<8x8x32xf32> to vector<8x32xf32>
    %c0_8 = arith.constant 0 : index
    %c0_9 = arith.constant 0 : index
    %20 = vector.load %arg3[%c0_8, %c0_9] : memref<8x64xf32, #tpu.memory_space<vmem>>, vector<8x32xf32>
    tpu.vector_store %arg3[%c0_8, %c0_9], %18 {strides = array<i32>} : memref<8x64xf32, #tpu.memory_space<vmem>>, vector<8x32xf32>,
    %c0_10 = arith.constant 0 : index
    %c32 = arith.constant 32 : index
    %21 = vector.load %arg3[%c0_10, %c32] : memref<8x64xf32, #tpu.memory_space<vmem>>, vector<8x32xf32>
    tpu.vector_store %arg3[%c0_10, %c32], %19 {strides = array<i32>} : memref<8x64xf32, #tpu.memory_space<vmem>>, vector<8x32xf32>,
    %22 = vector.shape_cast %15 : vector<8x8x1xf32> to vector<8x8xf32>
    %c0_11 = arith.constant 0 : index
    %c0_12 = arith.constant 0 : index
    %23 = vector.load %arg4[%c0_11, %c0_12] : memref<8x8xf32, #tpu.memory_space<vmem>>, vector<8x8xf32>
    tpu.vector_store %arg4[%c0_11, %c0_12], %22 {strides = array<i32>} : memref<8x8xf32, #tpu.memory_space<vmem>>, vector<8x8xf32>,
    return
  }
  func.func @transform_0(%arg0: i32) -> (i32, i32, i32) {
    %c0_i32 = arith.constant 0 : i32
    %c0_i32_0 = arith.constant 0 : i32
    %c0_i32_1 = arith.constant 0 : i32
    return %arg0, %c0_i32, %c0_i32_0 : i32, i32, i32
  }
  func.func @transform_1(%arg0: i32) -> (i32, i32) {
    %c0_i32 = arith.constant 0 : i32
    %c0_i32_0 = arith.constant 0 : i32
    %c0_i32_1 = arith.constant 0 : i32
    return %c0_i32, %c0_i32_0 : i32, i32
  }
  func.func @transform_2(%arg0: i32) -> (i32, i32) {
    %c0_i32 = arith.constant 0 : i32
    %c0_i32_0 = arith.constant 0 : i32
    return %arg0, %c0_i32 : i32, i32
  }
  func.func @transform_3(%arg0: i32) -> (i32, i32) {
    %c0_i32 = arith.constant 0 : i32
    %c0_i32_0 = arith.constant 0 : i32
    return %arg0, %c0_i32 : i32, i32
  }
}

</mosaic_0001>

<llo_original>
// kernel: tpu_custom_call.1
$region0: #{tpu_custom_call.1}
  #allocation0 [shape = 'u32[]', space=smem, size = 0x4, offset = 0x4, fixed_abs, tag = 'smem constant byte address 0x4 - core index']
  #allocation1 [shape = 'u32[144,128]{1,0:T(1,128)}', space=vmem, size = 0x12000, scoped, tag = 'internal scratch']
  %s0 = inlined_call_operand.hbm [shape: f32[8,8,32], index: 0, kind: input, shape index: {}]
  %s1 = inlined_call_operand.vmem [shape: f32[1,32], index: 1, kind: input, shape index: {}]
  %s2 = inlined_call_operand.hbm [shape: f32[8,64], index: 2, kind: output, shape index: {0}]
  %s3 = inlined_call_operand.hbm [shape: f32[8,8], index: 3, kind: output, shape index: {1}]
  %4 = xla_tuple %s2, %s3
  %s5 = sld [smem:[#allocation0]]
  $region30: #{tpu_custom_call.1} parent=0
    _
  %s7 = ssub.s32 1, %s5
  %s8 = scalar_select 0, %s7, %s5
  $region1: #{tpu_custom_call.1} parent=0
    #allocation2 [shape = 'u8[32768]{0}', space=vmem, size = 0x8000, scoped, tag = 'input window, operand 0, single buffered']
    #allocation3 [shape = 's32[1]{0}', space=sflag, size = 0x4, scoped, tag = 'scoped memory for tpu_custom_call.1']
    #allocation4 [shape = 's32[1]{0}', space=sflag, size = 0x4, scoped, tag = 'scoped memory for tpu_custom_call.1']
    #allocation5 [shape = 'u8[4096]{0}', space=vmem, size = 0x1000, scoped, tag = 'output window, operand 0, single buffered']
    #allocation6 [shape = 'u8[4096]{0}', space=vmem, size = 0x1000, scoped, tag = 'output window, operand 1, single buffered']
    #allocation7 [shape = 's32[1]{0}', space=sflag, size = 0x4, scoped, tag = 'scoped memory for tpu_custom_call.1']
    %9 = vsyncpa [#allocation3], 0
    %10 = vsyncpa [#allocation4], 0
    %11 = vsyncpa [#allocation7], 0
    // Predicated region
    $region2: #{tpu_custom_call.1} parent=1 // pred_check
      _
    $region3: #{tpu_custom_call.1} parent=1 // pred_check_branch
      %13 = sbr.rel (0) target = $region5
    $region4: #{tpu_custom_call.1} parent=1 // pred_region
      %s15 = ssub.s32 1024, 1024
      %16 = vsyncadd [#allocation3], %s15
      %s17 = sshll.u32 [#allocation2], 4
      %s18 = int_to_ptr.vmem [resolvable:$true] %s17
      %23 = dma.hbm_to_vmem [thread:$0]  %s0, 1024, %s18, [#allocation3], 128, 128, 8
    $region5: #{tpu_custom_call.1} parent=1 // pred_fallthru
      _
    // Predicated region
    $region6: #{tpu_custom_call.1} parent=1 // pred_check
      _
    $region7: #{tpu_custom_call.1} parent=1 // pred_check_branch
      %25 = sbr.rel (0) target = $region9
    $region8: #{tpu_custom_call.1} parent=1 // pred_region
      _
    $region9: #{tpu_custom_call.1} parent=1 // pred_fallthru
      _
    // Predicated region
    $region10: #{tpu_custom_call.1} parent=1 // pred_check
      _
    $region11: #{tpu_custom_call.1} parent=1 // pred_check_branch
      %27 = sbr.rel (0) target = $region13
    $region12: #{tpu_custom_call.1} parent=1 // pred_region
      %28 = dma.done [#allocation3], 1024
    $region13: #{tpu_custom_call.1} parent=1 // pred_fallthru
      _
    %v29 = vld [vmem:[#allocation2] sm:$0xff]
    %v30 = vld [vmem:[#allocation2 + $0x8] sm:$0xff]
    %v31 = vld [vmem:[#allocation2 + $0x10] sm:$0xff]
    %v32 = vld [vmem:[#allocation2 + $0x18] sm:$0xff]
    %v33 = vld [vmem:[#allocation2 + $0x20] sm:$0xff]
    %v34 = vld [vmem:[#allocation2 + $0x28] sm:$0xff]
    %v35 = vld [vmem:[#allocation2 + $0x30] sm:$0xff]
    %v36 = vld [vmem:[#allocation2 + $0x38] sm:$0xff]
    %v37 = vld [vmem:[%s1] sm:$0x1]
    %v39 = vlaneseq
    %v40 = vshrl.u32 %v39, 7
    %v41 = vsub.s32 0, %v40
    %v42 = vrot.slane %v37, %v41
    %v44 = vmul.f32 %v29, %v42
    %v45 = vmul.f32 %v30, %v42
    %v46 = vmul.f32 %v31, %v42
    %v47 = vmul.f32 %v32, %v42
    %v48 = vmul.f32 %v33, %v42
    %v49 = vmul.f32 %v34, %v42
    %v50 = vmul.f32 %v35, %v42
    %v51 = vmul.f32 %v36, %v42
    %vm52 = vcmask 261120
    %v53 = vsel %vm52, %v44, 0.0
    %54 = vadd.xlane.f32.xlu0 %v53
    %v55 = vpop.xlane.xlu0 %54
    %v56 = vsel %vm52, %v45, 0.0
    %57 = vadd.xlane.f32.xlu0 %v56
    %v58 = vpop.xlane.xlu0 %57
    %v59 = vsel %vm52, %v46, 0.0
    %60 = vadd.xlane.f32.xlu0 %v59
    %v61 = vpop.xlane.xlu0 %60
    %v62 = vsel %vm52, %v47, 0.0
    %63 = vadd.xlane.f32.xlu0 %v62
    %v64 = vpop.xlane.xlu0 %63
    %v65 = vsel %vm52, %v48, 0.0
    %66 = vadd.xlane.f32.xlu0 %v65
    %v67 = vpop.xlane.xlu0 %66
    %v68 = vsel %vm52, %v49, 0.0
    %69 = vadd.xlane.f32.xlu0 %v68
    %v70 = vpop.xlane.xlu0 %69
    %v71 = vsel %vm52, %v50, 0.0
    %72 = vadd.xlane.f32.xlu0 %v71
    %v73 = vpop.xlane.xlu0 %72
    %v74 = vsel %vm52, %v51, 0.0
    %75 = vadd.xlane.f32.xlu0 %v74
    %v76 = vpop.xlane.xlu0 %75
    %v77 = vrot.slane %v55, 4
    %v78 = vmax.f32 %v55, %v77
    %v79 = vrot.slane %v78, 2
    %v80 = vmax.f32 %v78, %v79
    %v81 = vrot.slane %v80, 1
    %v82 = vmax.f32 %v80, %v81
    %v83 = vrot.slane %v58, 4
    %v84 = vmax.f32 %v58, %v83
    %v85 = vrot.slane %v84, 2
    %v86 = vmax.f32 %v84, %v85
    %v87 = vrot.slane %v86, 1
    %v88 = vmax.f32 %v86, %v87
    %v89 = vrot.slane %v61, 4
    %v90 = vmax.f32 %v61, %v89
    %v91 = vrot.slane %v90, 2
    %v92 = vmax.f32 %v90, %v91
    %v93 = vrot.slane %v92, 1
    %v94 = vmax.f32 %v92, %v93
    %v95 = vrot.slane %v64, 4
    %v96 = vmax.f32 %v64, %v95
    %v97 = vrot.slane %v96, 2
    %v98 = vmax.f32 %v96, %v97
    %v99 = vrot.slane %v98, 1
    %v100 = vmax.f32 %v98, %v99
    %v101 = vrot.slane %v67, 4
    %v102 = vmax.f32 %v67, %v101
    %v103 = vrot.slane %v102, 2
    %v104 = vmax.f32 %v102, %v103
    %v105 = vrot.slane %v104, 1
    %v106 = vmax.f32 %v104, %v105
    %v107 = vrot.slane %v70, 4
    %v108 = vmax.f32 %v70, %v107
    %v109 = vrot.slane %v108, 2
    %v110 = vmax.f32 %v108, %v109
    %v111 = vrot.slane %v110, 1
    %v112 = vmax.f32 %v110, %v111
    %v113 = vrot.slane %v73, 4
    %v114 = vmax.f32 %v73, %v113
    %v115 = vrot.slane %v114, 2
    %v116 = vmax.f32 %v114, %v115
    %v117 = vrot.slane %v116, 1
    %v118 = vmax.f32 %v116, %v117
    %v119 = vrot.slane %v76, 4
    %v120 = vmax.f32 %v76, %v119
    %v121 = vrot.slane %v120, 2
    %v122 = vmax.f32 %v120, %v121
    %v123 = vrot.slane %v122, 1
    %v124 = vmax.f32 %v122, %v123
    %v125 = vsub.f32 %v55, %v82
    %v126 = vsub.f32 %v58, %v88
    %v127 = vsub.f32 %v61, %v94
    %v128 = vsub.f32 %v64, %v100
    %v129 = vsub.f32 %v67, %v106
    %v130 = vsub.f32 %v70, %v112
    %v131 = vsub.f32 %v73, %v118
    %v132 = vsub.f32 %v76, %v124
    %v133 = vmul.f32 %v125, 1.442695
    %v134 = vpow.pop %v133
    %v135 = vmul.f32 %v126, 1.442695
    %v136 = vpow.pop %v135
    %v137 = vmul.f32 %v127, 1.442695
    %v138 = vpow.pop %v137
    %v139 = vmul.f32 %v128, 1.442695
    %v140 = vpow.pop %v139
    %v141 = vmul.f32 %v129, 1.442695
    %v142 = vpow.pop %v141
    %v143 = vmul.f32 %v130, 1.442695
    %v144 = vpow.pop %v143
    %v145 = vmul.f32 %v131, 1.442695
    %v146 = vpow.pop %v145
    %v147 = vmul.f32 %v132, 1.442695
    %v148 = vpow.pop %v147
    %v149 = vrot.slane %v134, 4
    %v150 = vadd.f32 %v134, %v149
    %v151 = vrot.slane %v150, 2
    %v152 = vadd.f32 %v150, %v151
    %v153 = vrot.slane %v152, 1
    %v154 = vadd.f32 %v152, %v153
    %v155 = vrot.slane %v136, 4
    %v156 = vadd.f32 %v136, %v155
    %v157 = vrot.slane %v156, 2
    %v158 = vadd.f32 %v156, %v157
    %v159 = vrot.slane %v158, 1
    %v160 = vadd.f32 %v158, %v159
    %v161 = vrot.slane %v138, 4
    %v162 = vadd.f32 %v138, %v161
    %v163 = vrot.slane %v162, 2
    %v164 = vadd.f32 %v162, %v163
    %v165 = vrot.slane %v164, 1
    %v166 = vadd.f32 %v164, %v165
    %v167 = vrot.slane %v140, 4
    %v168 = vadd.f32 %v140, %v167
    %v169 = vrot.slane %v168, 2
    %v170 = vadd.f32 %v168, %v169
    %v171 = vrot.slane %v170, 1
    %v172 = vadd.f32 %v170, %v171
    %v173 = vrot.slane %v142, 4
    %v174 = vadd.f32 %v142, %v173
    %v175 = vrot.slane %v174, 2
    %v176 = vadd.f32 %v174, %v175
    %v177 = vrot.slane %v176, 1
    %v178 = vadd.f32 %v176, %v177
    %v179 = vrot.slane %v144, 4
    %v180 = vadd.f32 %v144, %v179
    %v181 = vrot.slane %v180, 2
    %v182 = vadd.f32 %v180, %v181
    %v183 = vrot.slane %v182, 1
    %v184 = vadd.f32 %v182, %v183
    %v185 = vrot.slane %v146, 4
    %v186 = vadd.f32 %v146, %v185
    %v187 = vrot.slane %v186, 2
    %v188 = vadd.f32 %v186, %v187
    %v189 = vrot.slane %v188, 1
    %v190 = vadd.f32 %v188, %v189
    %v191 = vrot.slane %v148, 4
    %v192 = vadd.f32 %v148, %v191
    %v193 = vrot.slane %v192, 2
    %v194 = vadd.f32 %v192, %v193
    %v195 = vrot.slane %v194, 1
    %v196 = vadd.f32 %v194, %v195
    %v197 = vrcp.pop %v154
    %v198 = vmul.f32 %v134, %v197
    %v199 = vrcp.pop %v160
    %v200 = vmul.f32 %v136, %v199
    %v201 = vrcp.pop %v166
    %v202 = vmul.f32 %v138, %v201
    %v203 = vrcp.pop %v172
    %v204 = vmul.f32 %v140, %v203
    %v205 = vrcp.pop %v178
    %v206 = vmul.f32 %v142, %v205
    %v207 = vrcp.pop %v184
    %v208 = vmul.f32 %v144, %v207
    %v209 = vrcp.pop %v190
    %v210 = vmul.f32 %v146, %v209
    %v211 = vrcp.pop %v196
    %v212 = vmul.f32 %v148, %v211
    %v213 = vmul.f32 %v198, %v29
    %v214 = vmul.f32 %v200, %v30
    %v215 = vmul.f32 %v202, %v31
    %v216 = vmul.f32 %v204, %v32
    %v217 = vmul.f32 %v206, %v33
    %v218 = vmul.f32 %v208, %v34
    %v219 = vmul.f32 %v210, %v35
    %v220 = vmul.f32 %v212, %v36
    %v221 = vsel %vm52, %v213, 0.0
    %v222 = vrot.slane %v221, 4
    %v223 = vadd.f32 %v221, %v222
    %v224 = vrot.slane %v223, 2
    %v225 = vadd.f32 %v223, %v224
    %v226 = vrot.slane %v225, 1
    %v227 = vadd.f32 %v225, %v226
    %v228 = vsel %vm52, %v214, 0.0
    %v229 = vrot.slane %v228, 4
    %v230 = vadd.f32 %v228, %v229
    %v231 = vrot.slane %v230, 2
    %v232 = vadd.f32 %v230, %v231
    %v233 = vrot.slane %v232, 1
    %v234 = vadd.f32 %v232, %v233
    %v235 = vsel %vm52, %v215, 0.0
    %v236 = vrot.slane %v235, 4
    %v237 = vadd.f32 %v235, %v236
    %v238 = vrot.slane %v237, 2
    %v239 = vadd.f32 %v237, %v238
    %v240 = vrot.slane %v239, 1
    %v241 = vadd.f32 %v239, %v240
    %v242 = vsel %vm52, %v216, 0.0
    %v243 = vrot.slane %v242, 4
    %v244 = vadd.f32 %v242, %v243
    %v245 = vrot.slane %v244, 2
    %v246 = vadd.f32 %v244, %v245
    %v247 = vrot.slane %v246, 1
    %v248 = vadd.f32 %v246, %v247
    %v249 = vsel %vm52, %v217, 0.0
    %v250 = vrot.slane %v249, 4
    %v251 = vadd.f32 %v249, %v250
    %v252 = vrot.slane %v251, 2
    %v253 = vadd.f32 %v251, %v252
    %v254 = vrot.slane %v253, 1
    %v255 = vadd.f32 %v253, %v254
    %v256 = vsel %vm52, %v218, 0.0
    %v257 = vrot.slane %v256, 4
    %v258 = vadd.f32 %v256, %v257
    %v259 = vrot.slane %v258, 2
    %v260 = vadd.f32 %v258, %v259
    %v261 = vrot.slane %v260, 1
    %v262 = vadd.f32 %v260, %v261
    %v263 = vsel %vm52, %v219, 0.0
    %v264 = vrot.slane %v263, 4
    %v265 = vadd.f32 %v263, %v264
    %v266 = vrot.slane %v265, 2
    %v267 = vadd.f32 %v265, %v266
    %v268 = vrot.slane %v267, 1
    %v269 = vadd.f32 %v267, %v268
    %v270 = vsel %vm52, %v220, 0.0
    %v271 = vrot.slane %v270, 4
    %v272 = vadd.f32 %v270, %v271
    %v273 = vrot.slane %v272, 2
    %v274 = vadd.f32 %v272, %v273
    %v275 = vrot.slane %v274, 1
    %v276 = vadd.f32 %v274, %v275
    %v277 = vsel %vm52, %v29, -inf
    %v278 = vrot.slane %v277, 4
    %v279 = vmax.f32 %v277, %v278
    %v280 = vrot.slane %v279, 2
    %v281 = vmax.f32 %v279, %v280
    %v282 = vrot.slane %v281, 1
    %v283 = vmax.f32 %v281, %v282
    %v284 = vsel %vm52, %v30, -inf
    %v285 = vrot.slane %v284, 4
    %v286 = vmax.f32 %v284, %v285
    %v287 = vrot.slane %v286, 2
    %v288 = vmax.f32 %v286, %v287
    %v289 = vrot.slane %v288, 1
    %v290 = vmax.f32 %v288, %v289
    %v291 = vsel %vm52, %v31, -inf
    %v292 = vrot.slane %v291, 4
    %v293 = vmax.f32 %v291, %v292
    %v294 = vrot.slane %v293, 2
    %v295 = vmax.f32 %v293, %v294
    %v296 = vrot.slane %v295, 1
    %v297 = vmax.f32 %v295, %v296
    %v298 = vsel %vm52, %v32, -inf
    %v299 = vrot.slane %v298, 4
    %v300 = vmax.f32 %v298, %v299
    %v301 = vrot.slane %v300, 2
    %v302 = vmax.f32 %v300, %v301
    %v303 = vrot.slane %v302, 1
    %v304 = vmax.f32 %v302, %v303
    %v305 = vsel %vm52, %v33, -inf
    %v306 = vrot.slane %v305, 4
    %v307 = vmax.f32 %v305, %v306
    %v308 = vrot.slane %v307, 2
    %v309 = vmax.f32 %v307, %v308
    %v310 = vrot.slane %v309, 1
    %v311 = vmax.f32 %v309, %v310
    %v312 = vsel %vm52, %v34, -inf
    %v313 = vrot.slane %v312, 4
    %v314 = vmax.f32 %v312, %v313
    %v315 = vrot.slane %v314, 2
    %v316 = vmax.f32 %v314, %v315
    %v317 = vrot.slane %v316, 1
    %v318 = vmax.f32 %v316, %v317
    %v319 = vsel %vm52, %v35, -inf
    %v320 = vrot.slane %v319, 4
    %v321 = vmax.f32 %v319, %v320
    %v322 = vrot.slane %v321, 2
    %v323 = vmax.f32 %v321, %v322
    %v324 = vrot.slane %v323, 1
    %v325 = vmax.f32 %v323, %v324
    %v326 = vsel %vm52, %v36, -inf
    %v327 = vrot.slane %v326, 4
    %v328 = vmax.f32 %v326, %v327
    %v329 = vrot.slane %v328, 2
    %v330 = vmax.f32 %v328, %v329
    %v331 = vrot.slane %v330, 1
    %v332 = vmax.f32 %v330, %v331
    %vm341 = vcmask 1041409
    %v342 = vsel %vm341, %v234, %v227
    %vm343 = vcmask 1042434
    %v344 = vsel %vm343, %v241, %v342
    %vm345 = vcmask 1043459
    %v346 = vsel %vm345, %v248, %v344
    %vm347 = vcmask 1044484
    %v348 = vsel %vm347, %v255, %v346
    %vm349 = vcmask 1045509
    %v350 = vsel %vm349, %v262, %v348
    %vm351 = vcmask 1046534
    %v352 = vsel %vm351, %v269, %v350
    %vm353 = vcmask 1047559
    %v354 = vsel %vm353, %v276, %v352
    %356 = vst.msk [vmem:[#allocation5] sm:$0xff] %vm52, %v354
    %v365 = vsel %vm341, %v290, %v283
    %v366 = vsel %vm343, %v297, %v365
    %v367 = vsel %vm345, %v304, %v366
    %v368 = vsel %vm347, %v311, %v367
    %v369 = vsel %vm349, %v318, %v368
    %v370 = vsel %vm351, %v325, %v369
    %v371 = vsel %vm353, %v332, %v370
    %372 = vrot.lane.b32.xlu0 %v371, 32
    %v373 = vpop.permute.xlu0 %372
    %vm375 = vcmask 523520
    %376 = vst.msk [vmem:[#allocation5] sm:$0xff] %vm375, %v373
    %v385 = vlaneseq
    %v386 = vand.u32 %v385, 127
    %v387 = vlaneseq
    %v388 = vshrl.u32 %v387, 7
    %v389 = vsub.s32 %v386, %v388
    %v390 = vrot.slane %v198, %v389
    %v391 = vlaneseq
    %v392 = vshrl.u32 %v391, 7
    %v393 = vsub.s32 %v386, %v392
    %v394 = vrot.slane %v200, %v393
    %v395 = vlaneseq
    %v396 = vshrl.u32 %v395, 7
    %v397 = vsub.s32 %v386, %v396
    %v398 = vrot.slane %v202, %v397
    %v399 = vlaneseq
    %v400 = vshrl.u32 %v399, 7
    %v401 = vsub.s32 %v386, %v400
    %v402 = vrot.slane %v204, %v401
    %v403 = vlaneseq
    %v404 = vshrl.u32 %v403, 7
    %v405 = vsub.s32 %v386, %v404
    %v406 = vrot.slane %v206, %v405
    %v407 = vlaneseq
    %v408 = vshrl.u32 %v407, 7
    %v409 = vsub.s32 %v386, %v408
    %v410 = vrot.slane %v208, %v409
    %v411 = vlaneseq
    %v412 = vshrl.u32 %v411, 7
    %v413 = vsub.s32 %v386, %v412
    %v414 = vrot.slane %v210, %v413
    %v415 = vlaneseq
    %v416 = vshrl.u32 %v415, 7
    %v417 = vsub.s32 %v386, %v416
    %v418 = vrot.slane %v212, %v417
    %v419 = vsel %vm341, %v394, %v390
    %v420 = vsel %vm343, %v398, %v419
    %v421 = vsel %vm345, %v402, %v420
    %v422 = vsel %vm347, %v406, %v421
    %v423 = vsel %vm349, %v410, %v422
    %v424 = vsel %vm351, %v414, %v423
    %v425 = vsel %vm353, %v418, %v424
    %vm427 = vcmask 64512
    %428 = vst.msk [vmem:[#allocation6] sm:$0xff] %vm427, %v425
    // Predicated region
    $region14: #{tpu_custom_call.1} parent=1 // pred_check
      _
    $region15: #{tpu_custom_call.1} parent=1 // pred_check_branch
      %430 = sbr.rel (0) target = $region17
    $region16: #{tpu_custom_call.1} parent=1 // pred_region
      %s432 = ssub.s32 128, 128
      %433 = vsyncadd [#allocation4], %s432
      %s435 = sshll.u32 [#allocation5], 4
      %s436 = int_to_ptr.vmem [resolvable:$true] %s435
      %438 = dma.vmem_to_hbm [thread:$0]  %s436, 128, %s2, [#allocation4]
    $region17: #{tpu_custom_call.1} parent=1 // pred_fallthru
      _
    // Predicated region
    $region18: #{tpu_custom_call.1} parent=1 // pred_check
      _
    $region19: #{tpu_custom_call.1} parent=1 // pred_check_branch
      %440 = sbr.rel (0) target = $region21
    $region20: #{tpu_custom_call.1} parent=1 // pred_region
      %s442 = ssub.s32 128, 128
      %443 = vsyncadd [#allocation7], %s442
      %s445 = sshll.u32 [#allocation6], 4
      %s446 = int_to_ptr.vmem [resolvable:$true] %s445
      %448 = dma.vmem_to_hbm [thread:$0]  %s446, 128, %s3, [#allocation7]
    $region21: #{tpu_custom_call.1} parent=1 // pred_fallthru
      _
    // Predicated region
    $region22: #{tpu_custom_call.1} parent=1 // pred_check
      _
    $region23: #{tpu_custom_call.1} parent=1 // pred_check_branch
      %450 = sbr.rel (0) target = $region25
    $region24: #{tpu_custom_call.1} parent=1 // pred_region
      %451 = dma.done [#allocation4], 128
    $region25: #{tpu_custom_call.1} parent=1 // pred_fallthru
      _
    // Predicated region
    $region26: #{tpu_custom_call.1} parent=1 // pred_check
      _
    $region27: #{tpu_custom_call.1} parent=1 // pred_check_branch
      %453 = sbr.rel (0) target = $region29
    $region28: #{tpu_custom_call.1} parent=1 // pred_region
      %454 = dma.done [#allocation7], 128
    $region29: #{tpu_custom_call.1} parent=1 // pred_fallthru
      _
    %455 = vsyncpa [#allocation3], 1
    %456 = vsyncpa [#allocation4], 1
    %457 = vsyncpa [#allocation7], 1

</llo_original>
